<compile_context>
chip_gen: v6e
topology: v6e:2x2x1
jax: 0.10.0
libtpu: 0.0.40
codegen_flags: <defaults>
</compile_context>

<pallas_src>
import jax
import jax.numpy as jnp
from jax.experimental import pallas as pl
from jax.experimental.pallas import tpu as pltpu

_LN_EPS = 1e-12


# ---------------------------------------------------------------------------
# Fused kernel: dense + (dropout=id) + residual add + LayerNorm
# ---------------------------------------------------------------------------
def _self_output_kernel(x_ref, res_ref, w_ref, b_ref, gamma_ref, beta_ref, o_ref):
    # Dense: matching native-dtype operands on the MXU, f32 accumulation.
    y = jnp.dot(x_ref[...], w_ref[...], preferred_element_type=jnp.float32)  # [tm, H]
    y = y + b_ref[...].astype(jnp.float32)

    # TODO(synk): dropout is identity at inference; training-mode dropout would
    # need pltpu.prng_seed / prng_random_bits plus a keep-probability input.

    # Residual add + LayerNorm over H (eps=1e-12), all in f32.
    # d = y - mean is computed once and reused for variance and normalization.
    y = y + res_ref[...].astype(jnp.float32)
    mean = jnp.mean(y, axis=-1, keepdims=True)
    d = y - mean
    var = jnp.mean(d * d, axis=-1, keepdims=True)
    out = d * jax.lax.rsqrt(var + _LN_EPS)
    out = out * gamma_ref[...].astype(jnp.float32) + beta_ref[...].astype(jnp.float32)
    o_ref[...] = out.astype(o_ref.dtype)


# ---------------------------------------------------------------------------
# Generation-aware tile / VMEM-limit selection.
# ---------------------------------------------------------------------------
def _choose_tile_and_vmem(M, H, x_dtype, res_dtype, out_dtype, w_dtype):
    try:
        info = pltpu.get_tpu_info()
        vmem_cap = int(getattr(info, "vmem_capacity_bytes", 64 * 1024 * 1024))
    except Exception:
        vmem_cap = 64 * 1024 * 1024  # conservative fallback (v7x per-TC budget)

    mib = 1024 * 1024
    if vmem_cap <= 96 * mib:
        # v7x: 64 MiB per TensorCore -> leave headroom, cap around 48 MiB.
        budget = min(48 * mib, (vmem_cap * 3) // 4)
    else:
        # v5e / v6e: 128 MiB physical -> allow ~100 MiB instead of the scoped
        # default so tm can grow.
        budget = min(100 * mib, (vmem_cap * 4) // 5)

    isz = lambda dt: jnp.dtype(dt).itemsize
    stream_row = H * (isz(x_dtype) + isz(res_dtype) + isz(out_dtype))  # per token, per buffer
    residents = 2 * H * H * isz(w_dtype) + 2 * 3 * H * 4               # weight (2x, worst case) + vectors
    f32_row = 2 * H * 4                                                # f32 epilogue intermediates

    def need(tm):
        return 2 * tm * stream_row + tm * f32_row + residents

    # Multiples of 256 (also multiples of 128, so v5e-friendly); 128 fallback.
    candidates = (2048, 1792, 1536, 1280, 1024, 768, 512, 256, 128)
    tm = 128
    for c in candidates:
        if need(c) <= budget:
            tm = c
            break
    return tm, int(budget)


# ---------------------------------------------------------------------------
# Wrapper
# ---------------------------------------------------------------------------
def bert_self_output(hidden_states, input_tensor, params, *, tm=None):
    """hidden_states, input_tensor: [B, S, H]; params holds dense/LN weights."""
    B, S, H = hidden_states.shape
    M = B * S
    x = hidden_states.reshape(M, H)
    res = input_tensor.reshape(M, H)

    # Match MXU operand dtypes: if activations are bf16, feed the weight as
    # bf16 too — a mixed f32/bf16 dot silently promotes to a slow f32 matmul.
    w = params["dense_w_t"].astype(x.dtype)
    b = params["dense_b"]
    gamma = params["ln_gamma"]
    beta = params["ln_beta"]

    auto_tm, vmem_limit = _choose_tile_and_vmem(
        M, H, x.dtype, res.dtype, hidden_states.dtype, w.dtype)
    if tm is None:
        tm = auto_tm
    tm = min(tm, M)
    if M % tm != 0 and tm % 8 != 0:
        tm = M  # keep partial-tile block shapes sublane-aligned

    def build(single_buffer_residents):
        def resident(shape):
            if single_buffer_residents:
                return pl.BlockSpec(shape, lambda i: (0, 0),
                                    pipeline_mode=pl.Buffered(1))
            return pl.BlockSpec(shape, lambda i: (0, 0))

        return pl.pallas_call(
            _self_output_kernel,
            out_shape=jax.ShapeDtypeStruct((M, H), hidden_states.dtype),
            grid_spec=pltpu.PrefetchScalarGridSpec(
                num_scalar_prefetch=0,
                grid=(pl.cdiv(M, tm),),
                in_specs=[
                    pl.BlockSpec((tm, H), lambda i: (i, 0)),   # hidden_states tile
                    pl.BlockSpec((tm, H), lambda i: (i, 0)),   # residual tile
                    resident((H, H)),                          # dense weight (resident)
                    resident((1, H)),                          # dense bias   (resident)
                    resident((1, H)),                          # LN gamma     (resident)
                    resident((1, H)),                          # LN beta      (resident)
                ],
                out_specs=pl.BlockSpec((tm, H), lambda i: (i, 0)),
            ),
            compiler_params=pltpu.CompilerParams(
                dimension_semantics=("parallel",),   # shards M across v7x's 2 TCs
                vmem_limit_bytes=vmem_limit,
            ),
        )

    try:
        out = build(True)(x, res, w, b, gamma, beta)
    except Exception:
        # pipeline_mode=pl.Buffered(1) not supported by this jax / lowering;
        # fall back to default double-buffered resident operands.
        out = build(False)(x, res, w, b, gamma, beta)
    return out.reshape(B, S, H)


# ---------------------------------------------------------------------------
# Pure-JAX reference for verification.
# ---------------------------------------------------------------------------
def _ref_forward(hidden_states, input_tensor, params):
    y = hidden_states @ params["dense_w_t"] + params["dense_b"][0]
    y = y + input_tensor
    mean = jnp.mean(y, axis=-1, keepdims=True)
    var = jnp.mean((y - mean) ** 2, axis=-1, keepdims=True)
    y = (y - mean) / jnp.sqrt(var + _LN_EPS)
    return y * params["ln_gamma"][0] + params["ln_beta"][0]


if __name__ == "__main__":
    # Small config: batch=2, seq=8, hidden=128
    B, S, H = 2, 8, 128
    key = jax.random.PRNGKey(0)
    k0, k1, k2, k3 = jax.random.split(key, 4)

    bound = 1.0 / jnp.sqrt(H)
    dense_w = jax.random.uniform(k0, (H, H), jnp.float32, -bound, bound)  # [out, in]
    dense_b = jax.random.uniform(k1, (1, H), jnp.float32, -bound, bound)

    params = {
        "dense_w_t": dense_w.T,              # [in, out] so kernel does x @ W^T
        "dense_b": dense_b,                  # [1, H]
        "ln_gamma": jnp.ones((1, H), jnp.float32),
        "ln_beta": jnp.zeros((1, H), jnp.float32),
    }

    hidden_states = jax.random.normal(k2, (B, S, H), jnp.float32)
    input_tensor = jax.random.normal(k3, (B, S, H), jnp.float32)

    out = jax.block_until_ready(bert_self_output(hidden_states, input_tensor, params))
    ref = _ref_forward(hidden_states, input_tensor, params)
    assert out.shape == (B, S, H)
    assert jnp.allclose(out, ref, atol=1e-4, rtol=1e-4), "mismatch vs reference"

    # Partial last M-tile coverage (M % tm != 0): M = 48, tm = 32.
    B2, S2 = 2, 24
    h2 = jax.random.normal(jax.random.PRNGKey(1), (B2, S2, H), jnp.float32)
    r2 = jax.random.normal(jax.random.PRNGKey(2), (B2, S2, H), jnp.float32)
    out2 = jax.block_until_ready(bert_self_output(h2, r2, params, tm=32))
    ref2 = _ref_forward(h2, r2, params)
    assert jnp.allclose(out2, ref2, atol=1e-4, rtol=1e-4), "partial-tile mismatch"

    print("KERNEL_OK")
</pallas_src>

<mosaic_0001>
module attributes {stable_mosaic.version = 11 : i64} {
  func.func @_self_output_kernel(%arg0: i32, %arg1: memref<16x128xf32, #tpu.memory_space<vmem>>, %arg2: memref<16x128xf32, #tpu.memory_space<vmem>>, %arg3: memref<128x128xf32, #tpu.memory_space<vmem>>, %arg4: memref<1x128xf32, #tpu.memory_space<vmem>>, %arg5: memref<1x128xf32, #tpu.memory_space<vmem>>, %arg6: memref<1x128xf32, #tpu.memory_space<vmem>>, %arg7: memref<16x128xf32, #tpu.memory_space<vmem>>) attributes {dimension_semantics = [#tpu.dimension_semantics<parallel>], iteration_bounds = array<i64: 1>, scalar_prefetch = 0 : i64, scratch_operands = 0 : i64, tpu.core_type = #tpu.core_type<tc>, window_params = [{transform_indices = @transform_0, window_bounds = array<i64: 16, 128>}, {transform_indices = @transform_1, window_bounds = array<i64: 16, 128>}, {pipeline_mode = #tpu.pipeline_mode<synchronous>, transform_indices = @transform_2, window_bounds = array<i64: 128, 128>}, {pipeline_mode = #tpu.pipeline_mode<synchronous>, transform_indices = @transform_3, window_bounds = array<i64: 1, 128>}, {pipeline_mode = #tpu.pipeline_mode<synchronous>, transform_indices = @transform_4, window_bounds = array<i64: 1, 128>}, {pipeline_mode = #tpu.pipeline_mode<synchronous>, transform_indices = @transform_5, window_bounds = array<i64: 1, 128>}, {transform_indices = @transform_6, window_bounds = array<i64: 16, 128>}]} {
    %c0 = arith.constant 0 : index
    %c0_0 = arith.constant 0 : index
    %0 = vector.load %arg1[%c0, %c0_0] : memref<16x128xf32, #tpu.memory_space<vmem>>, vector<16x128xf32>
    %c0_1 = arith.constant 0 : index
    %c0_2 = arith.constant 0 : index
    %1 = vector.load %arg3[%c0_1, %c0_2] : memref<128x128xf32, #tpu.memory_space<vmem>>, vector<128x128xf32>
    %cst = arith.constant dense<0.000000e+00> : vector<16x128xf32>
    %2 = tpu.matmul %0, %1, %cst {dimension_numbers = #tpu.dot_dimension_numbers<[1], [0], [0], [1], [0, 0, 1, 1], [], []>} : vector<16x128xf32>, vector<128x128xf32>, vector<16x128xf32> -> vector<16x128xf32>
    %c0_3 = arith.constant 0 : index
    %c0_4 = arith.constant 0 : index
    %3 = vector.load %arg4[%c0_3, %c0_4] : memref<1x128xf32, #tpu.memory_space<vmem>>, vector<1x128xf32>
    %4 = vector.broadcast %3 : vector<1x128xf32> to vector<16x128xf32>
    %5 = arith.addf %2, %4 : vector<16x128xf32>
    %c0_5 = arith.constant 0 : index
    %c0_6 = arith.constant 0 : index
    %6 = vector.load %arg2[%c0_5, %c0_6] : memref<16x128xf32, #tpu.memory_space<vmem>>, vector<16x128xf32>
    %7 = arith.addf %5, %6 : vector<16x128xf32>
    %cst_7 = arith.constant dense<0.000000e+00> : vector<16xf32>
    %8 = vector.multi_reduction <add>, %7, %cst_7 [1] : vector<16x128xf32> to vector<16xf32>
    %9 = vector.shape_cast %8 : vector<16xf32> to vector<16x1xf32>
    %cst_8 = arith.constant 1.280000e+02 : f32
    %10 = vector.broadcast %cst_8 : f32 to vector<16x1xf32>
    %11 = arith.divf %9, %10 : vector<16x1xf32>
    %12 = vector.broadcast %11 : vector<16x1xf32> to vector<16x128xf32>
    %13 = arith.subf %7, %12 : vector<16x128xf32>
    %14 = arith.mulf %13, %13 : vector<16x128xf32>
    %cst_9 = arith.constant dense<0.000000e+00> : vector<16xf32>
    %15 = vector.multi_reduction <add>, %14, %cst_9 [1] : vector<16x128xf32> to vector<16xf32>
    %16 = vector.shape_cast %15 : vector<16xf32> to vector<16x1xf32>
    %cst_10 = arith.constant 1.280000e+02 : f32
    %17 = vector.broadcast %cst_10 : f32 to vector<16x1xf32>
    %18 = arith.divf %16, %17 : vector<16x1xf32>
    %cst_11 = arith.constant 9.99999996E-13 : f32
    %19 = vector.broadcast %cst_11 : f32 to vector<16x1xf32>
    %20 = arith.addf %18, %19 : vector<16x1xf32>
    %21 = math.rsqrt %20 : vector<16x1xf32>
    %22 = vector.broadcast %21 : vector<16x1xf32> to vector<16x128xf32>
    %23 = arith.mulf %13, %22 : vector<16x128xf32>
    %c0_12 = arith.constant 0 : index
    %c0_13 = arith.constant 0 : index
    %24 = vector.load %arg5[%c0_12, %c0_13] : memref<1x128xf32, #tpu.memory_space<vmem>>, vector<1x128xf32>
    %25 = vector.broadcast %24 : vector<1x128xf32> to vector<16x128xf32>
    %26 = arith.mulf %23, %25 : vector<16x128xf32>
    %c0_14 = arith.constant 0 : index
    %c0_15 = arith.constant 0 : index
    %27 = vector.load %arg6[%c0_14, %c0_15] : memref<1x128xf32, #tpu.memory_space<vmem>>, vector<1x128xf32>
    %28 = vector.broadcast %27 : vector<1x128xf32> to vector<16x128xf32>
    %29 = arith.addf %26, %28 : vector<16x128xf32>
    %c0_16 = arith.constant 0 : index
    %c0_17 = arith.constant 0 : index
    %30 = vector.load %arg7[%c0_16, %c0_17] : memref<16x128xf32, #tpu.memory_space<vmem>>, vector<16x128xf32>
    tpu.vector_store %arg7[%c0_16, %c0_17], %29 {strides = array<i32>} : memref<16x128xf32, #tpu.memory_space<vmem>>, vector<16x128xf32>,
    return
  }
  func.func @transform_0(%arg0: i32) -> (i32, i32) {
    %c0_i32 = arith.constant 0 : i32
    %c0_i32_0 = arith.constant 0 : i32
    return %arg0, %c0_i32 : i32, i32
  }
  func.func @transform_1(%arg0: i32) -> (i32, i32) {
    %c0_i32 = arith.constant 0 : i32
    %c0_i32_0 = arith.constant 0 : i32
    return %arg0, %c0_i32 : i32, i32
  }
  func.func @transform_2(%arg0: i32) -> (i32, i32) {
    %c0_i32 = arith.constant 0 : i32
    %c0_i32_0 = arith.constant 0 : i32
    %c0_i32_1 = arith.constant 0 : i32
    return %c0_i32, %c0_i32_0 : i32, i32
  }
  func.func @transform_3(%arg0: i32) -> (i32, i32) {
    %c0_i32 = arith.constant 0 : i32
    %c0_i32_0 = arith.constant 0 : i32
    %c0_i32_1 = arith.constant 0 : i32
    return %c0_i32, %c0_i32_0 : i32, i32
  }
  func.func @transform_4(%arg0: i32) -> (i32, i32) {
    %c0_i32 = arith.constant 0 : i32
    %c0_i32_0 = arith.constant 0 : i32
    %c0_i32_1 = arith.constant 0 : i32
    return %c0_i32, %c0_i32_0 : i32, i32
  }
  func.func @transform_5(%arg0: i32) -> (i32, i32) {
    %c0_i32 = arith.constant 0 : i32
    %c0_i32_0 = arith.constant 0 : i32
    %c0_i32_1 = arith.constant 0 : i32
    return %c0_i32, %c0_i32_0 : i32, i32
  }
  func.func @transform_6(%arg0: i32) -> (i32, i32) {
    %c0_i32 = arith.constant 0 : i32
    %c0_i32_0 = arith.constant 0 : i32
    return %arg0, %c0_i32 : i32, i32
  }
}

module attributes {stable_mosaic.version = 11 : i64} {
  func.func @_self_output_kernel(%arg0: i32, %arg1: memref<16x128xf32, #tpu.memory_space<vmem>>, %arg2: memref<16x128xf32, #tpu.memory_space<vmem>>, %arg3: memref<128x128xf32, #tpu.memory_space<vmem>>, %arg4: memref<1x128xf32, #tpu.memory_space<vmem>>, %arg5: memref<1x128xf32, #tpu.memory_space<vmem>>, %arg6: memref<1x128xf32, #tpu.memory_space<vmem>>, %arg7: memref<16x128xf32, #tpu.memory_space<vmem>>) attributes {dimension_semantics = [#tpu.dimension_semantics<parallel>], iteration_bounds = array<i64: 1>, scalar_prefetch = 0 : i64, scratch_operands = 0 : i64, tpu.core_type = #tpu.core_type<tc>, window_params = [{transform_indices = @transform_0, window_bounds = array<i64: 16, 128>}, {transform_indices = @transform_1, window_bounds = array<i64: 16, 128>}, {pipeline_mode = #tpu.pipeline_mode<synchronous>, transform_indices = @transform_2, window_bounds = array<i64: 128, 128>}, {pipeline_mode = #tpu.pipeline_mode<synchronous>, transform_indices = @transform_3, window_bounds = array<i64: 1, 128>}, {pipeline_mode = #tpu.pipeline_mode<synchronous>, transform_indices = @transform_4, window_bounds = array<i64: 1, 128>}, {pipeline_mode = #tpu.pipeline_mode<synchronous>, transform_indices = @transform_5, window_bounds = array<i64: 1, 128>}, {transform_indices = @transform_6, window_bounds = array<i64: 16, 128>}]} {
    %c0 = arith.constant 0 : index
    %c0_0 = arith.constant 0 : index
    %0 = vector.load %arg1[%c0, %c0_0] : memref<16x128xf32, #tpu.memory_space<vmem>>, vector<16x128xf32>
    %c0_1 = arith.constant 0 : index
    %c0_2 = arith.constant 0 : index
    %1 = vector.load %arg3[%c0_1, %c0_2] : memref<128x128xf32, #tpu.memory_space<vmem>>, vector<128x128xf32>
    %cst = arith.constant dense<0.000000e+00> : vector<16x128xf32>
    %2 = tpu.matmul %0, %1, %cst {dimension_numbers = #tpu.dot_dimension_numbers<[1], [0], [0], [1], [0, 0, 1, 1], [], []>} : vector<16x128xf32>, vector<128x128xf32>, vector<16x128xf32> -> vector<16x128xf32>
    %c0_3 = arith.constant 0 : index
    %c0_4 = arith.constant 0 : index
    %3 = vector.load %arg4[%c0_3, %c0_4] : memref<1x128xf32, #tpu.memory_space<vmem>>, vector<1x128xf32>
    %4 = vector.broadcast %3 : vector<1x128xf32> to vector<16x128xf32>
    %5 = arith.addf %2, %4 : vector<16x128xf32>
    %c0_5 = arith.constant 0 : index
    %c0_6 = arith.constant 0 : index
    %6 = vector.load %arg2[%c0_5, %c0_6] : memref<16x128xf32, #tpu.memory_space<vmem>>, vector<16x128xf32>
    %7 = arith.addf %5, %6 : vector<16x128xf32>
    %cst_7 = arith.constant dense<0.000000e+00> : vector<16xf32>
    %8 = vector.multi_reduction <add>, %7, %cst_7 [1] : vector<16x128xf32> to vector<16xf32>
    %9 = vector.shape_cast %8 : vector<16xf32> to vector<16x1xf32>
    %cst_8 = arith.constant 1.280000e+02 : f32
    %10 = vector.broadcast %cst_8 : f32 to vector<16x1xf32>
    %11 = arith.divf %9, %10 : vector<16x1xf32>
    %12 = vector.broadcast %11 : vector<16x1xf32> to vector<16x128xf32>
    %13 = arith.subf %7, %12 : vector<16x128xf32>
    %14 = arith.mulf %13, %13 : vector<16x128xf32>
    %cst_9 = arith.constant dense<0.000000e+00> : vector<16xf32>
    %15 = vector.multi_reduction <add>, %14, %cst_9 [1] : vector<16x128xf32> to vector<16xf32>
    %16 = vector.shape_cast %15 : vector<16xf32> to vector<16x1xf32>
    %cst_10 = arith.constant 1.280000e+02 : f32
    %17 = vector.broadcast %cst_10 : f32 to vector<16x1xf32>
    %18 = arith.divf %16, %17 : vector<16x1xf32>
    %cst_11 = arith.constant 9.99999996E-13 : f32
    %19 = vector.broadcast %cst_11 : f32 to vector<16x1xf32>
    %20 = arith.addf %18, %19 : vector<16x1xf32>
    %21 = math.rsqrt %20 : vector<16x1xf32>
    %22 = vector.broadcast %21 : vector<16x1xf32> to vector<16x128xf32>
    %23 = arith.mulf %13, %22 : vector<16x128xf32>
    %c0_12 = arith.constant 0 : index
    %c0_13 = arith.constant 0 : index
    %24 = vector.load %arg5[%c0_12, %c0_13] : memref<1x128xf32, #tpu.memory_space<vmem>>, vector<1x128xf32>
    %25 = vector.broadcast %24 : vector<1x128xf32> to vector<16x128xf32>
    %26 = arith.mulf %23, %25 : vector<16x128xf32>
    %c0_14 = arith.constant 0 : index
    %c0_15 = arith.constant 0 : index
    %27 = vector.load %arg6[%c0_14, %c0_15] : memref<1x128xf32, #tpu.memory_space<vmem>>, vector<1x128xf32>
    %28 = vector.broadcast %27 : vector<1x128xf32> to vector<16x128xf32>
    %29 = arith.addf %26, %28 : vector<16x128xf32>
    %c0_16 = arith.constant 0 : index
    %c0_17 = arith.constant 0 : index
    %30 = vector.load %arg7[%c0_16, %c0_17] : memref<16x128xf32, #tpu.memory_space<vmem>>, vector<16x128xf32>
    tpu.vector_store %arg7[%c0_16, %c0_17], %29 {strides = array<i32>} : memref<16x128xf32, #tpu.memory_space<vmem>>, vector<16x128xf32>,
    return
  }
  func.func @transform_0(%arg0: i32) -> (i32, i32) {
    %c0_i32 = arith.constant 0 : i32
    %c0_i32_0 = arith.constant 0 : i32
    return %arg0, %c0_i32 : i32, i32
  }
  func.func @transform_1(%arg0: i32) -> (i32, i32) {
    %c0_i32 = arith.constant 0 : i32
    %c0_i32_0 = arith.constant 0 : i32
    return %arg0, %c0_i32 : i32, i32
  }
  func.func @transform_2(%arg0: i32) -> (i32, i32) {
    %c0_i32 = arith.constant 0 : i32
    %c0_i32_0 = arith.constant 0 : i32
    %c0_i32_1 = arith.constant 0 : i32
    return %c0_i32, %c0_i32_0 : i32, i32
  }
  func.func @transform_3(%arg0: i32) -> (i32, i32) {
    %c0_i32 = arith.constant 0 : i32
    %c0_i32_0 = arith.constant 0 : i32
    %c0_i32_1 = arith.constant 0 : i32
    return %c0_i32, %c0_i32_0 : i32, i32
  }
  func.func @transform_4(%arg0: i32) -> (i32, i32) {
    %c0_i32 = arith.constant 0 : i32
    %c0_i32_0 = arith.constant 0 : i32
    %c0_i32_1 = arith.constant 0 : i32
    return %c0_i32, %c0_i32_0 : i32, i32
  }
  func.func @transform_5(%arg0: i32) -> (i32, i32) {
    %c0_i32 = arith.constant 0 : i32
    %c0_i32_0 = arith.constant 0 : i32
    %c0_i32_1 = arith.constant 0 : i32
    return %c0_i32, %c0_i32_0 : i32, i32
  }
  func.func @transform_6(%arg0: i32) -> (i32, i32) {
    %c0_i32 = arith.constant 0 : i32
    %c0_i32_0 = arith.constant 0 : i32
    return %arg0, %c0_i32 : i32, i32
  }
}

</mosaic_0001>

<llo_original>
// kernel: tpu_custom_call.1
$region0: #{tpu_custom_call.1}
  #allocation0 [shape = 'u32[]', space=smem, size = 0x4, offset = 0x4, fixed_abs, tag = 'smem constant byte address 0x4 - core index']
  #allocation1 [shape = 'u32[144,128]{1,0:T(1,128)}', space=vmem, size = 0x12000, scoped, tag = 'internal scratch']
  %s0 = inlined_call_operand.hbm [shape: f32[16,128], index: 0, kind: input, shape index: {}]
  %s1 = inlined_call_operand.hbm [shape: f32[16,128], index: 1, kind: input, shape index: {}]
  %s2 = inlined_call_operand.hbm [shape: f32[128,128], index: 2, kind: input, shape index: {}]
  %s3 = inlined_call_operand.vmem [shape: f32[1,128], index: 3, kind: input, shape index: {}]
  %s4 = inlined_call_operand.vmem [shape: f32[1,128], index: 4, kind: input, shape index: {}]
  %s5 = inlined_call_operand.vmem [shape: f32[1,128], index: 5, kind: input, shape index: {}]
  %s6 = inlined_call_operand.hbm [shape: f32[16,128], index: 6, kind: output, shape index: {}]
  %s7 = sld [smem:[#allocation0]]
  $region46: #{tpu_custom_call.1} parent=0
    _
  %s9 = ssub.s32 1, %s7
  %s10 = scalar_select 0, %s9, %s7
  $region1: #{tpu_custom_call.1} parent=0
    #allocation2 [shape = 'u8[8192]{0}', space=vmem, size = 0x2000, scoped, tag = 'input window, operand 0, single buffered']
    #allocation3 [shape = 's32[1]{0}', space=sflag, size = 0x4, scoped, tag = 'scoped memory for tpu_custom_call.1']
    #allocation4 [shape = 's32[1]{0}', space=sflag, size = 0x4, scoped, tag = 'scoped memory for tpu_custom_call.1']
    #allocation5 [shape = 'u8[8192]{0}', space=vmem, size = 0x2000, scoped, tag = 'input window, operand 1, single buffered']
    #allocation6 [shape = 's32[1]{0}', space=sflag, size = 0x4, scoped, tag = 'scoped memory for tpu_custom_call.1']
    #allocation7 [shape = 'u8[65536]{0}', space=vmem, size = 0x10000, scoped, tag = 'input window, operand 2, single buffered']
    #allocation8 [shape = 'u8[8192]{0}', space=vmem, size = 0x2000, scoped, tag = 'output window, operand 0, single buffered']
    %11 = vsyncpa [#allocation3], 0
    %12 = vsyncpa [#allocation6], 0
    %13 = vsyncpa [#allocation4], 0
    // Predicated region
    $region2: #{tpu_custom_call.1} parent=1 // pred_check
      _
    $region3: #{tpu_custom_call.1} parent=1 // pred_check_branch
      %15 = sbr.rel (0) target = $region5
    $region4: #{tpu_custom_call.1} parent=1 // pred_region
      %s17 = ssub.s32 256, 256
      %18 = vsyncadd [#allocation3], %s17
      %s19 = sshll.u32 [#allocation2], 4
      %s20 = int_to_ptr.vmem [resolvable:$true] %s19
      %25 = dma.hbm_to_vmem [thread:$0]  %s0, 256, %s20, [#allocation3], 128, 128, 8
    $region5: #{tpu_custom_call.1} parent=1 // pred_fallthru
      _
    // Predicated region
    $region6: #{tpu_custom_call.1} parent=1 // pred_check
      _
    $region7: #{tpu_custom_call.1} parent=1 // pred_check_branch
      %27 = sbr.rel (0) target = $region9
    $region8: #{tpu_custom_call.1} parent=1 // pred_region
      %s29 = ssub.s32 256, 256
      %30 = vsyncadd [#allocation6], %s29
      %s31 = sshll.u32 [#allocation5], 4
      %s32 = int_to_ptr.vmem [resolvable:$true] %s31
      %37 = dma.hbm_to_vmem [thread:$0]  %s1, 256, %s32, [#allocation6], 128, 128, 8
    $region9: #{tpu_custom_call.1} parent=1 // pred_fallthru
      _
    // Predicated region
    $region10: #{tpu_custom_call.1} parent=1 // pred_check
      _
    $region11: #{tpu_custom_call.1} parent=1 // pred_check_branch
      %39 = sbr.rel (0) target = $region13
    $region12: #{tpu_custom_call.1} parent=1 // pred_region
      %s41 = ssub.s32 2048, 2048
      %42 = vsyncadd [#allocation6], %s41
      %s43 = sshll.u32 [#allocation7], 4
      %s44 = int_to_ptr.vmem [resolvable:$true] %s43
      %49 = dma.hbm_to_vmem [thread:$0]  %s2, 2048, %s44, [#allocation6], 128, 128, 8
    $region13: #{tpu_custom_call.1} parent=1 // pred_fallthru
      _
    // Predicated region
    $region14: #{tpu_custom_call.1} parent=1 // pred_check
      _
    $region15: #{tpu_custom_call.1} parent=1 // pred_check_branch
      %51 = sbr.rel (0) target = $region17
    $region16: #{tpu_custom_call.1} parent=1 // pred_region
      _
    $region17: #{tpu_custom_call.1} parent=1 // pred_fallthru
      _
    // Predicated region
    $region18: #{tpu_custom_call.1} parent=1 // pred_check
      _
    $region19: #{tpu_custom_call.1} parent=1 // pred_check_branch
      %53 = sbr.rel (0) target = $region21
    $region20: #{tpu_custom_call.1} parent=1 // pred_region
      _
    $region21: #{tpu_custom_call.1} parent=1 // pred_fallthru
      _
    // Predicated region
    $region22: #{tpu_custom_call.1} parent=1 // pred_check
      _
    $region23: #{tpu_custom_call.1} parent=1 // pred_check_branch
      %55 = sbr.rel (0) target = $region25
    $region24: #{tpu_custom_call.1} parent=1 // pred_region
      _
    $region25: #{tpu_custom_call.1} parent=1 // pred_fallthru
      _
    // Predicated region
    $region26: #{tpu_custom_call.1} parent=1 // pred_check
      _
    $region27: #{tpu_custom_call.1} parent=1 // pred_check_branch
      %57 = sbr.rel (0) target = $region29
    $region28: #{tpu_custom_call.1} parent=1 // pred_region
      %58 = dma.done [#allocation3], 256
    $region29: #{tpu_custom_call.1} parent=1 // pred_fallthru
      _
    // Predicated region
    $region30: #{tpu_custom_call.1} parent=1 // pred_check
      _
    $region31: #{tpu_custom_call.1} parent=1 // pred_check_branch
      %60 = sbr.rel (0) target = $region33
    $region32: #{tpu_custom_call.1} parent=1 // pred_region
      %61 = dma.done [#allocation6], 256
    $region33: #{tpu_custom_call.1} parent=1 // pred_fallthru
      _
    // Predicated region
    $region34: #{tpu_custom_call.1} parent=1 // pred_check
      _
    $region35: #{tpu_custom_call.1} parent=1 // pred_check_branch
      %63 = sbr.rel (0) target = $region37
    $region36: #{tpu_custom_call.1} parent=1 // pred_region
      %64 = dma.done [#allocation6], 2048
    $region37: #{tpu_custom_call.1} parent=1 // pred_fallthru
      _
    %v65 = vld [vmem:[#allocation2] sm:$0xff]
    %v66 = vld [vmem:[#allocation2 + $0x8] sm:$0xff]
    %v67 = vld [vmem:[#allocation7] sm:$0xff]
    %v68 = vld [vmem:[#allocation7 + $0x8] sm:$0xff]
    %v69 = vld [vmem:[#allocation7 + $0x10] sm:$0xff]
    %v70 = vld [vmem:[#allocation7 + $0x18] sm:$0xff]
    %v71 = vld [vmem:[#allocation7 + $0x20] sm:$0xff]
    %v72 = vld [vmem:[#allocation7 + $0x28] sm:$0xff]
    %v73 = vld [vmem:[#allocation7 + $0x30] sm:$0xff]
    %v74 = vld [vmem:[#allocation7 + $0x38] sm:$0xff]
    %v75 = vld [vmem:[#allocation7 + $0x40] sm:$0xff]
    %v76 = vld [vmem:[#allocation7 + $0x48] sm:$0xff]
    %v77 = vld [vmem:[#allocation7 + $0x50] sm:$0xff]
    %v78 = vld [vmem:[#allocation7 + $0x58] sm:$0xff]
    %v79 = vld [vmem:[#allocation7 + $0x60] sm:$0xff]
    %v80 = vld [vmem:[#allocation7 + $0x68] sm:$0xff]
    %v81 = vld [vmem:[#allocation7 + $0x70] sm:$0xff]
    %v82 = vld [vmem:[#allocation7 + $0x78] sm:$0xff]
    %v83 = vld [vmem:[%s3] sm:$0x1]
    %v85 = vlaneseq
    %v86 = vshrl.u32 %v85, 7
    %v87 = vsub.s32 0, %v86
    %v88 = vrot.slane %v83, %v87
    %90 = vmatprep.subr.mxu0 0.0
    %91 = vmatpush1.msra.mxu0 %v82
    %92 = vmatprep.subr.mxu0 0.0
    %93 = vmatpush1.msra.mxu0 %v81
    %94 = vmatprep.subr.mxu0 0.0
    %95 = vmatpush1.msra.mxu0 %v80
    %96 = vmatprep.subr.mxu0 0.0
    %97 = vmatpush1.msra.mxu0 %v79
    %98 = vmatprep.subr.mxu0 0.0
    %99 = vmatpush1.msra.mxu0 %v78
    %100 = vmatprep.subr.mxu0 0.0
    %101 = vmatpush1.msra.mxu0 %v77
    %102 = vmatprep.subr.mxu0 0.0
    %103 = vmatpush1.msra.mxu0 %v76
    %104 = vmatprep.subr.mxu0 0.0
    %105 = vmatpush1.msra.mxu0 %v75
    %106 = vmatprep.subr.mxu0 0.0
    %107 = vmatpush1.msra.mxu0 %v74
    %108 = vmatprep.subr.mxu0 0.0
    %109 = vmatpush1.msra.mxu0 %v73
    %110 = vmatprep.subr.mxu0 0.0
    %111 = vmatpush1.msra.mxu0 %v72
    %112 = vmatprep.subr.mxu0 0.0
    %113 = vmatpush1.msra.mxu0 %v71
    %114 = vmatprep.subr.mxu0 0.0
    %115 = vmatpush1.msra.mxu0 %v70
    %116 = vmatprep.subr.mxu0 0.0
    %117 = vmatpush1.msra.mxu0 %v69
    %118 = vmatprep.subr.mxu0 0.0
    %119 = vmatpush1.msra.mxu0 %v68
    %120 = vmatprep.subr.mxu0 0.0
    %121 = vmatpush1.msra.mxu0 %v67
    %122 = vmatprep.subr.mxu0 0.0
    %123 = vmatpush2.msra.mxu0 0.0
    %124 = vmatprep.subr.mxu0 0.0
    %125 = vmatpush2.msra.mxu0 0.0
    %126 = vmatprep.subr.mxu0 0.0
    %127 = vmatpush2.msra.mxu0 0.0
    %128 = vmatprep.subr.mxu0 0.0
    %129 = vmatpush2.msra.mxu0 0.0
    %130 = vmatprep.subr.mxu0 0.0
    %131 = vmatpush2.msra.mxu0 0.0
    %132 = vmatprep.subr.mxu0 0.0
    %133 = vmatpush2.msra.mxu0 0.0
    %134 = vmatprep.subr.mxu0 0.0
    %135 = vmatpush2.msra.mxu0 0.0
    %136 = vmatprep.subr.mxu0 0.0
    %137 = vmatpush2.msra.mxu0 0.0
    %138 = vmatprep.subr.mxu0 0.0
    %139 = vmatpush2.msra.mxu0 0.0
    %140 = vmatprep.subr.mxu0 0.0
    %141 = vmatpush2.msra.mxu0 0.0
    %142 = vmatprep.subr.mxu0 0.0
    %143 = vmatpush2.msra.mxu0 0.0
    %144 = vmatprep.subr.mxu0 0.0
    %145 = vmatpush2.msra.mxu0 0.0
    %146 = vmatprep.subr.mxu0 0.0
    %147 = vmatpush2.msra.mxu0 0.0
    %148 = vmatprep.subr.mxu0 0.0
    %149 = vmatpush2.msra.mxu0 0.0
    %150 = vmatprep.subr.mxu0 0.0
    %151 = vmatpush2.msra.mxu0 0.0
    %152 = vmatprep.subr.mxu0 0.0
    %153 = vmatpush2.msra.mxu0 0.0
    %154 = vmatprep.mubr.f32.mxu0 0.0
    %155 = vmatmul.mubr.f32.gmra.mxu0 %v65
    %v156 = vpop.f32.mrf.mxu0
    %v157 = vadd.f32 %v88, %v156
    %v158 = vpop.f32.mrf.mxu0
    %159 = vmatprep.mubr.f32.mxu0 0.0
    %160 = vmatmul.mubr.f32.gmra.mxu0 %v66
    %v161 = vpop.f32.mrf.mxu0
    %v162 = vadd.f32 %v88, %v161
    %v163 = vpop.f32.mrf.mxu0
    %164 = vdwg.mxu0
    %v165 = vld [vmem:[#allocation5] sm:$0xff]
    %v166 = vld [vmem:[#allocation5 + $0x8] sm:$0xff]
    %v167 = vadd.f32 %v157, %v165
    %v168 = vadd.f32 %v162, %v166
    %169 = vadd.xlane.f32.xlu0 %v167
    %v170 = vpop.xlane.xlu0 %169
    %171 = vadd.xlane.f32.xlu0 %v168
    %v172 = vpop.xlane.xlu0 %171
    %v173 = vrcp.pop 128.0
    %v174 = vmul.f32 %v170, %v173
    %v175 = vmul.f32 %v172, %v173
    %v176 = vsub.f32 %v167, %v174
    %v177 = vsub.f32 %v168, %v175
    %v178 = vmul.f32 %v176, %v176
    %v179 = vmul.f32 %v177, %v177
    %180 = vadd.xlane.f32.xlu0 %v178
    %v181 = vpop.xlane.xlu0 %180
    %182 = vadd.xlane.f32.xlu0 %v179
    %v183 = vpop.xlane.xlu0 %182
    %v184 = vmul.f32 %v181, %v173
    %v185 = vmul.f32 %v183, %v173
    %v186 = vadd.f32 %v184, 1e-12
    %v187 = vadd.f32 %v185, 1e-12
    %v188 = vrsqrt.pop %v186
    %v189 = vrsqrt.pop %v187
    %v190 = vmul.f32 %v176, %v188
    %v191 = vmul.f32 %v177, %v189
    %v192 = vld [vmem:[%s4] sm:$0x1]
    %v194 = vlaneseq
    %v195 = vshrl.u32 %v194, 7
    %v196 = vsub.s32 0, %v195
    %v197 = vrot.slane %v192, %v196
    %v199 = vmul.f32 %v190, %v197
    %v200 = vmul.f32 %v191, %v197
    %v201 = vld [vmem:[%s5] sm:$0x1]
    %v203 = vlaneseq
    %v204 = vshrl.u32 %v203, 7
    %v205 = vsub.s32 0, %v204
    %v206 = vrot.slane %v201, %v205
    %v208 = vadd.f32 %v199, %v206
    %v209 = vadd.f32 %v200, %v206
    %210 = vst [vmem:[#allocation8] sm:$0xff] %v208
    %211 = vst [vmem:[#allocation8 + $0x8] sm:$0xff] %v209
    // Predicated region
    $region38: #{tpu_custom_call.1} parent=1 // pred_check
      _
    $region39: #{tpu_custom_call.1} parent=1 // pred_check_branch
      %213 = sbr.rel (0) target = $region41
    $region40: #{tpu_custom_call.1} parent=1 // pred_region
      %s215 = ssub.s32 256, 256
      %216 = vsyncadd [#allocation4], %s215
      %s217 = sshll.u32 [#allocation8], 4
      %s218 = int_to_ptr.vmem [resolvable:$true] %s217
      %223 = dma.vmem_to_hbm [thread:$0]  %s218, 256, %s6, [#allocation4], 128, 128, 8
    $region41: #{tpu_custom_call.1} parent=1 // pred_fallthru
      _
    // Predicated region
    $region42: #{tpu_custom_call.1} parent=1 // pred_check
      _
    $region43: #{tpu_custom_call.1} parent=1 // pred_check_branch
      %225 = sbr.rel (0) target = $region45
    $region44: #{tpu_custom_call.1} parent=1 // pred_region
      %226 = dma.done [#allocation4], 256
    $region45: #{tpu_custom_call.1} parent=1 // pred_fallthru
      _
    %227 = vsyncpa [#allocation3], 1
    %228 = vsyncpa [#allocation6], 1
    %229 = vsyncpa [#allocation4], 1

// kernel: tpu_custom_call.1
$region0: #{tpu_custom_call.1}
  #allocation0 [shape = 'u32[]', space=smem, size = 0x4, offset = 0x4, fixed_abs, tag = 'smem constant byte address 0x4 - core index']
  #allocation1 [shape = 'u32[144,128]{1,0:T(1,128)}', space=vmem, size = 0x12000, scoped, tag = 'internal scratch']
  %s0 = inlined_call_operand.hbm [shape: f32[16,128], index: 0, kind: input, shape index: {}]
  %s1 = inlined_call_operand.hbm [shape: f32[16,128], index: 1, kind: input, shape index: {}]
  %s2 = inlined_call_operand.hbm [shape: f32[128,128], index: 2, kind: input, shape index: {}]
  %s3 = inlined_call_operand.vmem [shape: f32[1,128], index: 3, kind: input, shape index: {}]
  %s4 = inlined_call_operand.vmem [shape: f32[1,128], index: 4, kind: input, shape index: {}]
  %s5 = inlined_call_operand.vmem [shape: f32[1,128], index: 5, kind: input, shape index: {}]
  %s6 = inlined_call_operand.hbm [shape: f32[16,128], index: 6, kind: output, shape index: {}]
  %s7 = sld [smem:[#allocation0]]
  $region46: #{tpu_custom_call.1} parent=0
    _
  %s9 = ssub.s32 1, %s7
  %s10 = scalar_select 0, %s9, %s7
  $region1: #{tpu_custom_call.1} parent=0
    #allocation2 [shape = 'u8[8192]{0}', space=vmem, size = 0x2000, scoped, tag = 'input window, operand 0, single buffered']
    #allocation3 [shape = 's32[1]{0}', space=sflag, size = 0x4, scoped, tag = 'scoped memory for tpu_custom_call.1']
    #allocation4 [shape = 's32[1]{0}', space=sflag, size = 0x4, scoped, tag = 'scoped memory for tpu_custom_call.1']
    #allocation5 [shape = 'u8[8192]{0}', space=vmem, size = 0x2000, scoped, tag = 'input window, operand 1, single buffered']
    #allocation6 [shape = 's32[1]{0}', space=sflag, size = 0x4, scoped, tag = 'scoped memory for tpu_custom_call.1']
    #allocation7 [shape = 'u8[65536]{0}', space=vmem, size = 0x10000, scoped, tag = 'input window, operand 2, single buffered']
    #allocation8 [shape = 'u8[8192]{0}', space=vmem, size = 0x2000, scoped, tag = 'output window, operand 0, single buffered']
    %11 = vsyncpa [#allocation3], 0
    %12 = vsyncpa [#allocation6], 0
    %13 = vsyncpa [#allocation4], 0
    // Predicated region
    $region2: #{tpu_custom_call.1} parent=1 // pred_check
      _
    $region3: #{tpu_custom_call.1} parent=1 // pred_check_branch
      %15 = sbr.rel (0) target = $region5
    $region4: #{tpu_custom_call.1} parent=1 // pred_region
      %s17 = ssub.s32 256, 256
      %18 = vsyncadd [#allocation3], %s17
      %s19 = sshll.u32 [#allocation2], 4
      %s20 = int_to_ptr.vmem [resolvable:$true] %s19
      %25 = dma.hbm_to_vmem [thread:$0]  %s0, 256, %s20, [#allocation3], 128, 128, 8
    $region5: #{tpu_custom_call.1} parent=1 // pred_fallthru
      _
    // Predicated region
    $region6: #{tpu_custom_call.1} parent=1 // pred_check
      _
    $region7: #{tpu_custom_call.1} parent=1 // pred_check_branch
      %27 = sbr.rel (0) target = $region9
    $region8: #{tpu_custom_call.1} parent=1 // pred_region
      %s29 = ssub.s32 256, 256
      %30 = vsyncadd [#allocation6], %s29
      %s31 = sshll.u32 [#allocation5], 4
      %s32 = int_to_ptr.vmem [resolvable:$true] %s31
      %37 = dma.hbm_to_vmem [thread:$0]  %s1, 256, %s32, [#allocation6], 128, 128, 8
    $region9: #{tpu_custom_call.1} parent=1 // pred_fallthru
      _
    // Predicated region
    $region10: #{tpu_custom_call.1} parent=1 // pred_check
      _
    $region11: #{tpu_custom_call.1} parent=1 // pred_check_branch
      %39 = sbr.rel (0) target = $region13
    $region12: #{tpu_custom_call.1} parent=1 // pred_region
      %s41 = ssub.s32 2048, 2048
      %42 = vsyncadd [#allocation6], %s41
      %s43 = sshll.u32 [#allocation7], 4
      %s44 = int_to_ptr.vmem [resolvable:$true] %s43
      %49 = dma.hbm_to_vmem [thread:$0]  %s2, 2048, %s44, [#allocation6], 128, 128, 8
    $region13: #{tpu_custom_call.1} parent=1 // pred_fallthru
      _
    // Predicated region
    $region14: #{tpu_custom_call.1} parent=1 // pred_check
      _
    $region15: #{tpu_custom_call.1} parent=1 // pred_check_branch
      %51 = sbr.rel (0) target = $region17
    $region16: #{tpu_custom_call.1} parent=1 // pred_region
      _
    $region17: #{tpu_custom_call.1} parent=1 // pred_fallthru
      _
    // Predicated region
    $region18: #{tpu_custom_call.1} parent=1 // pred_check
      _
    $region19: #{tpu_custom_call.1} parent=1 // pred_check_branch
      %53 = sbr.rel (0) target = $region21
    $region20: #{tpu_custom_call.1} parent=1 // pred_region
      _
    $region21: #{tpu_custom_call.1} parent=1 // pred_fallthru
      _
    // Predicated region
    $region22: #{tpu_custom_call.1} parent=1 // pred_check
      _
    $region23: #{tpu_custom_call.1} parent=1 // pred_check_branch
      %55 = sbr.rel (0) target = $region25
    $region24: #{tpu_custom_call.1} parent=1 // pred_region
      _
    $region25: #{tpu_custom_call.1} parent=1 // pred_fallthru
      _
    // Predicated region
    $region26: #{tpu_custom_call.1} parent=1 // pred_check
      _
    $region27: #{tpu_custom_call.1} parent=1 // pred_check_branch
      %57 = sbr.rel (0) target = $region29
    $region28: #{tpu_custom_call.1} parent=1 // pred_region
      %58 = dma.done [#allocation3], 256
    $region29: #{tpu_custom_call.1} parent=1 // pred_fallthru
      _
    // Predicated region
    $region30: #{tpu_custom_call.1} parent=1 // pred_check
      _
    $region31: #{tpu_custom_call.1} parent=1 // pred_check_branch
      %60 = sbr.rel (0) target = $region33
    $region32: #{tpu_custom_call.1} parent=1 // pred_region
      %61 = dma.done [#allocation6], 256
    $region33: #{tpu_custom_call.1} parent=1 // pred_fallthru
      _
    // Predicated region
    $region34: #{tpu_custom_call.1} parent=1 // pred_check
      _
    $region35: #{tpu_custom_call.1} parent=1 // pred_check_branch
      %63 = sbr.rel (0) target = $region37
    $region36: #{tpu_custom_call.1} parent=1 // pred_region
      %64 = dma.done [#allocation6], 2048
    $region37: #{tpu_custom_call.1} parent=1 // pred_fallthru
      _
    %v65 = vld [vmem:[#allocation2] sm:$0xff]
    %v66 = vld [vmem:[#allocation2 + $0x8] sm:$0xff]
    %v67 = vld [vmem:[#allocation7] sm:$0xff]
    %v68 = vld [vmem:[#allocation7 + $0x8] sm:$0xff]
    %v69 = vld [vmem:[#allocation7 + $0x10] sm:$0xff]
    %v70 = vld [vmem:[#allocation7 + $0x18] sm:$0xff]
    %v71 = vld [vmem:[#allocation7 + $0x20] sm:$0xff]
    %v72 = vld [vmem:[#allocation7 + $0x28] sm:$0xff]
    %v73 = vld [vmem:[#allocation7 + $0x30] sm:$0xff]
    %v74 = vld [vmem:[#allocation7 + $0x38] sm:$0xff]
    %v75 = vld [vmem:[#allocation7 + $0x40] sm:$0xff]
    %v76 = vld [vmem:[#allocation7 + $0x48] sm:$0xff]
    %v77 = vld [vmem:[#allocation7 + $0x50] sm:$0xff]
    %v78 = vld [vmem:[#allocation7 + $0x58] sm:$0xff]
    %v79 = vld [vmem:[#allocation7 + $0x60] sm:$0xff]
    %v80 = vld [vmem:[#allocation7 + $0x68] sm:$0xff]
    %v81 = vld [vmem:[#allocation7 + $0x70] sm:$0xff]
    %v82 = vld [vmem:[#allocation7 + $0x78] sm:$0xff]
    %v83 = vld [vmem:[%s3] sm:$0x1]
    %v85 = vlaneseq
    %v86 = vshrl.u32 %v85, 7
    %v87 = vsub.s32 0, %v86
    %v88 = vrot.slane %v83, %v87
    %90 = vmatprep.subr.mxu0 0.0
    %91 = vmatpush1.msra.mxu0 %v82
    %92 = vmatprep.subr.mxu0 0.0
    %93 = vmatpush1.msra.mxu0 %v81
    %94 = vmatprep.subr.mxu0 0.0
    %95 = vmatpush1.msra.mxu0 %v80
    %96 = vmatprep.subr.mxu0 0.0
    %97 = vmatpush1.msra.mxu0 %v79
    %98 = vmatprep.subr.mxu0 0.0
    %99 = vmatpush1.msra.mxu0 %v78
    %100 = vmatprep.subr.mxu0 0.0
    %101 = vmatpush1.msra.mxu0 %v77
    %102 = vmatprep.subr.mxu0 0.0
    %103 = vmatpush1.msra.mxu0 %v76
    %104 = vmatprep.subr.mxu0 0.0
    %105 = vmatpush1.msra.mxu0 %v75
    %106 = vmatprep.subr.mxu0 0.0
    %107 = vmatpush1.msra.mxu0 %v74
    %108 = vmatprep.subr.mxu0 0.0
    %109 = vmatpush1.msra.mxu0 %v73
    %110 = vmatprep.subr.mxu0 0.0
    %111 = vmatpush1.msra.mxu0 %v72
    %112 = vmatprep.subr.mxu0 0.0
    %113 = vmatpush1.msra.mxu0 %v71
    %114 = vmatprep.subr.mxu0 0.0
    %115 = vmatpush1.msra.mxu0 %v70
    %116 = vmatprep.subr.mxu0 0.0
    %117 = vmatpush1.msra.mxu0 %v69
    %118 = vmatprep.subr.mxu0 0.0
    %119 = vmatpush1.msra.mxu0 %v68
    %120 = vmatprep.subr.mxu0 0.0
    %121 = vmatpush1.msra.mxu0 %v67
    %122 = vmatprep.subr.mxu0 0.0
    %123 = vmatpush2.msra.mxu0 0.0
    %124 = vmatprep.subr.mxu0 0.0
    %125 = vmatpush2.msra.mxu0 0.0
    %126 = vmatprep.subr.mxu0 0.0
    %127 = vmatpush2.msra.mxu0 0.0
    %128 = vmatprep.subr.mxu0 0.0
    %129 = vmatpush2.msra.mxu0 0.0
    %130 = vmatprep.subr.mxu0 0.0
    %131 = vmatpush2.msra.mxu0 0.0
    %132 = vmatprep.subr.mxu0 0.0
    %133 = vmatpush2.msra.mxu0 0.0
    %134 = vmatprep.subr.mxu0 0.0
    %135 = vmatpush2.msra.mxu0 0.0
    %136 = vmatprep.subr.mxu0 0.0
    %137 = vmatpush2.msra.mxu0 0.0
    %138 = vmatprep.subr.mxu0 0.0
    %139 = vmatpush2.msra.mxu0 0.0
    %140 = vmatprep.subr.mxu0 0.0
    %141 = vmatpush2.msra.mxu0 0.0
    %142 = vmatprep.subr.mxu0 0.0
    %143 = vmatpush2.msra.mxu0 0.0
    %144 = vmatprep.subr.mxu0 0.0
    %145 = vmatpush2.msra.mxu0 0.0
    %146 = vmatprep.subr.mxu0 0.0
    %147 = vmatpush2.msra.mxu0 0.0
    %148 = vmatprep.subr.mxu0 0.0
    %149 = vmatpush2.msra.mxu0 0.0
    %150 = vmatprep.subr.mxu0 0.0
    %151 = vmatpush2.msra.mxu0 0.0
    %152 = vmatprep.subr.mxu0 0.0
    %153 = vmatpush2.msra.mxu0 0.0
    %154 = vmatprep.mubr.f32.mxu0 0.0
    %155 = vmatmul.mubr.f32.gmra.mxu0 %v65
    %v156 = vpop.f32.mrf.mxu0
    %v157 = vadd.f32 %v88, %v156
    %v158 = vpop.f32.mrf.mxu0
    %159 = vmatprep.mubr.f32.mxu0 0.0
    %160 = vmatmul.mubr.f32.gmra.mxu0 %v66
    %v161 = vpop.f32.mrf.mxu0
    %v162 = vadd.f32 %v88, %v161
    %v163 = vpop.f32.mrf.mxu0
    %164 = vdwg.mxu0
    %v165 = vld [vmem:[#allocation5] sm:$0xff]
    %v166 = vld [vmem:[#allocation5 + $0x8] sm:$0xff]
    %v167 = vadd.f32 %v157, %v165
    %v168 = vadd.f32 %v162, %v166
    %169 = vadd.xlane.f32.xlu0 %v167
    %v170 = vpop.xlane.xlu0 %169
    %171 = vadd.xlane.f32.xlu0 %v168
    %v172 = vpop.xlane.xlu0 %171
    %v173 = vrcp.pop 128.0
    %v174 = vmul.f32 %v170, %v173
    %v175 = vmul.f32 %v172, %v173
    %v176 = vsub.f32 %v167, %v174
    %v177 = vsub.f32 %v168, %v175
    %v178 = vmul.f32 %v176, %v176
    %v179 = vmul.f32 %v177, %v177
    %180 = vadd.xlane.f32.xlu0 %v178
    %v181 = vpop.xlane.xlu0 %180
    %182 = vadd.xlane.f32.xlu0 %v179
    %v183 = vpop.xlane.xlu0 %182
    %v184 = vmul.f32 %v181, %v173
    %v185 = vmul.f32 %v183, %v173
    %v186 = vadd.f32 %v184, 1e-12
    %v187 = vadd.f32 %v185, 1e-12
    %v188 = vrsqrt.pop %v186
    %v189 = vrsqrt.pop %v187
    %v190 = vmul.f32 %v176, %v188
    %v191 = vmul.f32 %v177, %v189
    %v192 = vld [vmem:[%s4] sm:$0x1]
    %v194 = vlaneseq
    %v195 = vshrl.u32 %v194, 7
    %v196 = vsub.s32 0, %v195
    %v197 = vrot.slane %v192, %v196
    %v199 = vmul.f32 %v190, %v197
    %v200 = vmul.f32 %v191, %v197
    %v201 = vld [vmem:[%s5] sm:$0x1]
    %v203 = vlaneseq
    %v204 = vshrl.u32 %v203, 7
    %v205 = vsub.s32 0, %v204
    %v206 = vrot.slane %v201, %v205
    %v208 = vadd.f32 %v199, %v206
    %v209 = vadd.f32 %v200, %v206
    %210 = vst [vmem:[#allocation8] sm:$0xff] %v208
    %211 = vst [vmem:[#allocation8 + $0x8] sm:$0xff] %v209
    // Predicated region
    $region38: #{tpu_custom_call.1} parent=1 // pred_check
      _
    $region39: #{tpu_custom_call.1} parent=1 // pred_check_branch
      %213 = sbr.rel (0) target = $region41
    $region40: #{tpu_custom_call.1} parent=1 // pred_region
      %s215 = ssub.s32 256, 256
      %216 = vsyncadd [#allocation4], %s215
      %s217 = sshll.u32 [#allocation8], 4
      %s218 = int_to_ptr.vmem [resolvable:$true] %s217
      %223 = dma.vmem_to_hbm [thread:$0]  %s218, 256, %s6, [#allocation4], 128, 128, 8
    $region41: #{tpu_custom_call.1} parent=1 // pred_fallthru
      _
    // Predicated region
    $region42: #{tpu_custom_call.1} parent=1 // pred_check
      _
    $region43: #{tpu_custom_call.1} parent=1 // pred_check_branch
      %225 = sbr.rel (0) target = $region45
    $region44: #{tpu_custom_call.1} parent=1 // pred_region
      %226 = dma.done [#allocation4], 256
    $region45: #{tpu_custom_call.1} parent=1 // pred_fallthru
      _
    %227 = vsyncpa [#allocation3], 1
    %228 = vsyncpa [#allocation6], 1
    %229 = vsyncpa [#allocation4], 1

</llo_original>
